<compile_context>
chip_gen: v7x
topology: tpu7x:2x2x1
jax: 0.10.0
libtpu: 0.0.40
codegen_flags: <defaults>
</compile_context>

<pallas_src>
import functools
import math

import jax
import jax.numpy as jnp
from jax.experimental import pallas as pl
from jax.experimental.pallas import tpu as pltpu

_VMEM_LIMIT = 48 * 1024 * 1024  # > default scoped limit, < physical on all gens


# ----------------------------------------------------------------------------
# Small helpers
# ----------------------------------------------------------------------------

def _round_up(x, m):
    return (x + m - 1) // m * m


def _choose_row_tile(m, target=256):
    """Largest row tile <= target; prefer a divisor of m (no padding)."""
    if m <= target:
        return m
    t = target
    while t >= 64:
        if m % t == 0:
            return t
        t -= 8
    return target  # caller pads


def _matmul_cost(m, k, n, transcendentals=0):
    return pl.CostEstimate(
        flops=int(2 * m * k * n),
        transcendentals=int(transcendentals),
        bytes_accessed=int(4 * (m * k + m * n) + 2 * k * n))


def _bf16(x):
    return x.astype(jnp.bfloat16)


def _layernorm(v, w, b, eps=1e-5):
    mu = jnp.mean(v, axis=-1, keepdims=True)
    var = jnp.mean((v - mu) ** 2, axis=-1, keepdims=True)
    return (v - mu) * jax.lax.rsqrt(var + eps) * w + b


def _softmax(s):
    m = jnp.max(s, axis=-1, keepdims=True)
    e = jnp.exp(s - m)
    return e * pl.reciprocal(jnp.sum(e, axis=-1, keepdims=True), approx=True)


# ----------------------------------------------------------------------------
# Pallas kernels
# ----------------------------------------------------------------------------

def _matmul_bias_kernel(x_ref, w_ref, b_ref, o_ref):
    # x: (TM, K) f32, w: (K, N) bf16, b: (1, N) f32 -> (TM, N)
    acc = jnp.dot(_bf16(x_ref[...]), w_ref[...],
                  preferred_element_type=jnp.float32)
    o_ref[...] = (acc + b_ref[...]).astype(o_ref.dtype)


def _ln_qkv_kernel(x_ref, lnw_ref, lnb_ref, wqkv_ref, o_ref):
    # LayerNorm1 + fused QKV projection (no bias): (TM, E) -> (TM, 3E) bf16.
    xn = _layernorm(x_ref[...], lnw_ref[...], lnb_ref[...])
    o_ref[...] = jnp.dot(_bf16(xn), wqkv_ref[...],
                         preferred_element_type=jnp.float32).astype(o_ref.dtype)


def _proj_residual_kernel(attn_ref, res_ref, wo_ref, o_ref):
    # Attention output projection (no bias) + residual add.
    acc = jnp.dot(_bf16(attn_ref[...]), wo_ref[...],
                  preferred_element_type=jnp.float32)
    o_ref[...] = (acc + res_ref[...]).astype(o_ref.dtype)


def _ln_mlp_residual_kernel(x_ref, lnw, lnb, w1, b1, w2, b2, o_ref):
    # LayerNorm2 + Linear + GELU(erf) + Linear + residual.
    x = x_ref[...]
    h = _layernorm(x, lnw[...], lnb[...])
    h = jnp.dot(_bf16(h), w1[...], preferred_element_type=jnp.float32) + b1[...]
    h = jax.nn.gelu(h, approximate=False)  # PyTorch nn.GELU default (erf)
    h = jnp.dot(_bf16(h), w2[...], preferred_element_type=jnp.float32) + b2[...]
    o_ref[...] = (x + h).astype(o_ref.dtype)


def _diff_attn_head_kernel(q_ref, k_ref, v_ref, lamf_ref, lami_ref, subw_ref,
                           o_ref, *, head_dim, seq_valid):
    # One differential-attention head for one batch element.
    #   q_ref / k_ref : (2, S, hd)   — [0] = q1/k1, [1] = q2/k2
    #   v_ref / o_ref : (S, 2*hd)
    S = q_ref.shape[1]
    scaling = head_dim ** -0.5
    dn = (((1,), (1,)), ((), ()))  # x @ y^T

    q1, q2 = _bf16(q_ref[0]), _bf16(q_ref[1])
    k1, k2 = _bf16(k_ref[0]), _bf16(k_ref[1])

    s1 = jax.lax.dot_general(q1, k1, dn,
                             preferred_element_type=jnp.float32) * scaling
    s2 = jax.lax.dot_general(q2, k2, dn,
                             preferred_element_type=jnp.float32) * scaling

    # TODO(synk): LM-style MultiheadDiffAttn uses a causal mask; ViT is
    #             bidirectional, so only padded key positions are masked.
    if seq_valid < S:
        col = jax.lax.broadcasted_iota(jnp.int32, (S, S), 1)
        pad_mask = col < seq_valid
        s1 = jnp.where(pad_mask, s1, -1e30)
        s2 = jnp.where(pad_mask, s2, -1e30)

    a = _softmax(s1) - lamf_ref[...] * _softmax(s2)          # (S, S) f32

    o = jnp.dot(_bf16(a), _bf16(v_ref[...]),
                preferred_element_type=jnp.float32)          # (S, 2*hd)

    # sub-layer RMSNorm (eps=1e-5, shared affine weight), then (1 - lambda_init)
    o = o * jax.lax.rsqrt(jnp.mean(o * o, axis=-1, keepdims=True) + 1e-5)
    o_ref[...] = (o * subw_ref[...] * (1.0 - lami_ref[...])).astype(o_ref.dtype)


def _head_kernel(x_ref, nw, nb, hw, hb, o_ref):
    # Final LayerNorm + classifier head (lane-padded num_classes).
    xn = _layernorm(x_ref[...], nw[...], nb[...])
    acc = jnp.dot(_bf16(xn), hw[...], preferred_element_type=jnp.float32)
    o_ref[...] = (acc + hb[...]).astype(o_ref.dtype)


# ----------------------------------------------------------------------------
# Launchers
# ----------------------------------------------------------------------------

def _row_launch(kernel, row_inputs, consts, out_cols, *,
                out_dtype=jnp.float32, target_tile=256, cost=None):
    """Run `kernel` over row tiles of (M, *) inputs; consts are full blocks."""
    M = row_inputs[0].shape[0]
    tm = _choose_row_tile(M, target_tile)
    Mp = _round_up(M, tm)
    if Mp != M:
        row_inputs = [jnp.pad(r, ((0, Mp - M), (0, 0))) for r in row_inputs]

    in_specs = [pl.BlockSpec((tm, r.shape[1]), lambda i: (i, 0))
                for r in row_inputs]
    # TODO(synk): mark constant weight specs pl.Buffered(1) (single-buffered) at
    #             realistic ViT sizes to halve their VMEM footprint.
    in_specs += [pl.BlockSpec(c.shape, lambda i, _nd=c.ndim: (0,) * _nd)
                 for c in consts]

    out = pl.pallas_call(
        kernel,
        grid=(Mp // tm,),
        in_specs=in_specs,
        out_specs=pl.BlockSpec((tm, out_cols), lambda i: (i, 0)),
        out_shape=jax.ShapeDtypeStruct((Mp, out_cols), out_dtype),
        compiler_params=pltpu.CompilerParams(
            dimension_semantics=("parallel",),
            vmem_limit_bytes=_VMEM_LIMIT),
        cost_estimate=cost,
    )(*row_inputs, *consts)
    return out[:M] if Mp != M else out


def run_diff_attention(qkv, lam_full, lam_init, subln_w,
                       num_heads, head_dim, seq_valid):
    # qkv: (B, S, 3E) bf16.  Host-side (XLA) layout plumbing puts heads on a
    # grid-able leading axis so the kernel never relayouts inside VMEM.
    B, S, E3 = qkv.shape
    E = E3 // 3
    q = qkv[:, :, :E].reshape(B, S, 2 * num_heads, head_dim).transpose(0, 2, 1, 3)
    k = qkv[:, :, E:2 * E].reshape(B, S, 2 * num_heads, head_dim).transpose(0, 2, 1, 3)
    v = qkv[:, :, 2 * E:].reshape(B, S, num_heads, 2 * head_dim).transpose(0, 2, 1, 3)

    kernel = functools.partial(_diff_attn_head_kernel,
                               head_dim=head_dim, seq_valid=seq_valid)
    out = pl.pallas_call(
        kernel,
        grid=(B, num_heads),
        in_specs=[
            pl.BlockSpec((None, 2, S, head_dim), lambda b, h: (b, h, 0, 0)),
            pl.BlockSpec((None, 2, S, head_dim), lambda b, h: (b, h, 0, 0)),
            pl.BlockSpec((None, None, S, 2 * head_dim), lambda b, h: (b, h, 0, 0)),
            pl.BlockSpec((1, 1), lambda b, h: (0, 0)),
            pl.BlockSpec((1, 1), lambda b, h: (0, 0)),
            pl.BlockSpec((1, 2 * head_dim), lambda b, h: (0, 0)),
        ],
        out_specs=pl.BlockSpec((None, None, S, 2 * head_dim),
                               lambda b, h: (b, h, 0, 0)),
        out_shape=jax.ShapeDtypeStruct((B, num_heads, S, 2 * head_dim),
                                       jnp.float32),
        compiler_params=pltpu.CompilerParams(
            dimension_semantics=("parallel", "parallel"),
            vmem_limit_bytes=_VMEM_LIMIT),
        cost_estimate=pl.CostEstimate(
            flops=int(8 * B * num_heads * S * S * head_dim),
            transcendentals=int(2 * B * num_heads * S * S),
            bytes_accessed=int(16 * B * S * E)),
    )(q, k, v, lam_full, lam_init, subln_w)

    return out.transpose(0, 2, 1, 3).reshape(B, S, E)


def run_transformer_block(x2d, p, batch, seq_pad, seq_valid, num_heads, head_dim):
    M, E = x2d.shape
    mlp_dim = p["w1"].shape[1]

    # LayerNorm1 + fused QKV projection, row-tiled over B*S.
    qkv = _row_launch(_ln_qkv_kernel, [x2d],
                      [p["ln1_w"], p["ln1_b"], p["wqkv"]], 3 * E,
                      out_dtype=jnp.bfloat16,
                      cost=_matmul_cost(M, E, 3 * E))

    # Multihead differential attention, grid over (batch, head).
    attn = run_diff_attention(qkv.reshape(batch, seq_pad, 3 * E),
                              p["lam_full"], p["lam_init"], p["subln_w"],
                              num_heads, head_dim, seq_valid)

    # Output projection + residual, row-tiled.
    x2d = _row_launch(_proj_residual_kernel, [attn.reshape(M, E), x2d],
                      [p["wo"]], E, cost=_matmul_cost(M, E, E))

    # LayerNorm2 + MLP + residual, row-tiled.
    # TODO(synk): at full ViT-B sizes on v7x (64 MiB VMEM), stream/split w1, w2
    #             instead of keeping both resident.
    x2d = _row_launch(
        _ln_mlp_residual_kernel, [x2d],
        [p["ln2_w"], p["ln2_b"], p["w1"], p["b1"], p["w2"], p["b2"]], E,
        cost=pl.CostEstimate(flops=int(4 * M * E * mlp_dim),
                             transcendentals=int(M * mlp_dim),
                             bytes_accessed=int(8 * M * E + 4 * E * mlp_dim)))
    return x2d


def classifier_head(cls_tokens, norm_w, norm_b, head_w, head_b):
    B = cls_tokens.shape[0]
    nc_pad = head_w.shape[1]
    return pl.pallas_call(
        _head_kernel,
        out_shape=jax.ShapeDtypeStruct((B, nc_pad), jnp.float32),
        compiler_params=pltpu.CompilerParams(vmem_limit_bytes=_VMEM_LIMIT),
    )(cls_tokens, norm_w, norm_b, head_w, head_b)


# ----------------------------------------------------------------------------
# Parameter initialization (deterministic, synthetic)
# ----------------------------------------------------------------------------

def init_params(key, *, image_size, patch_size, channels, embed_dim, depth,
                num_heads, mlp_dim, num_classes):
    assert image_size % patch_size == 0
    assert embed_dim % (2 * num_heads) == 0
    head_dim = embed_dim // num_heads // 2
    num_patches = (image_size // patch_size) ** 2
    cpp = channels * patch_size * patch_size
    nc_pad = _round_up(num_classes, 128)  # lane-dense classifier output
    bf16 = jnp.bfloat16

    keys = iter(jax.random.split(key, 8 + depth * 12))
    nrm = lambda shape, std: jax.random.normal(next(keys), shape, jnp.float32) * std

    params = {
        "patch_size": patch_size,
        "num_heads": num_heads,
        "head_dim": head_dim,
        "num_classes": num_classes,
        # Conv2d(patch, stride=patch) as a matmul: weight (E,C,P,P) -> (C*P*P, E)
        "proj_w": nrm((embed_dim, cpp), 0.02).T.reshape(cpp, embed_dim).astype(bf16),
        "proj_b": nrm((1, embed_dim), 0.02),
        "cls_token": jnp.zeros((1, 1, embed_dim), jnp.float32),
        "pos_embedding": nrm((1, num_patches + 1, embed_dim), 0.02),
        "norm_w": jnp.ones((1, embed_dim), jnp.float32),
        "norm_b": jnp.zeros((1, embed_dim), jnp.float32),
        "head_w": jnp.pad(nrm((embed_dim, num_classes), 0.02),
                          ((0, 0), (0, nc_pad - num_classes))).astype(bf16),
        "head_b": jnp.zeros((1, nc_pad), jnp.float32),
        "blocks": [],
    }

    for layer_idx in range(depth):
        lam_init = 0.8 - 0.6 * math.exp(-0.3 * layer_idx)
        lq1, lk1 = nrm((head_dim,), 0.1), nrm((head_dim,), 0.1)
        lq2, lk2 = nrm((head_dim,), 0.1), nrm((head_dim,), 0.1)
        lam_full = (jnp.exp(jnp.sum(lq1 * lk1)) - jnp.exp(jnp.sum(lq2 * lk2))
                    + lam_init)
        wq = nrm((embed_dim, embed_dim), 0.02)
        wk = nrm((embed_dim, embed_dim), 0.02)
        wv = nrm((embed_dim, embed_dim), 0.02)
        blk = {
            "ln1_w": jnp.ones((1, embed_dim), jnp.float32),
            "ln1_b": jnp.zeros((1, embed_dim), jnp.float32),
            "wqkv": jnp.concatenate([wq, wk, wv], axis=1).astype(bf16),  # (E, 3E)
            "wo": nrm((embed_dim, embed_dim), 0.02).astype(bf16),
            "lam_full": jnp.reshape(lam_full, (1, 1)).astype(jnp.float32),
            "lam_init": jnp.full((1, 1), lam_init, jnp.float32),
            "subln_w": jnp.ones((1, 2 * head_dim), jnp.float32),
            "ln2_w": jnp.ones((1, embed_dim), jnp.float32),
            "ln2_b": jnp.zeros((1, embed_dim), jnp.float32),
            "w1": nrm((embed_dim, mlp_dim), 0.02).astype(bf16),
            "b1": jnp.zeros((1, mlp_dim), jnp.float32),
            "w2": nrm((mlp_dim, embed_dim), 0.02).astype(bf16),
            "b2": jnp.zeros((1, embed_dim), jnp.float32),
        }
        params["blocks"].append(blk)
    return params


# ----------------------------------------------------------------------------
# Forward pass (host glue: patch extraction / concat / pad; compute in kernels)
# ----------------------------------------------------------------------------

def extract_patches(x, patch_size):
    # x: (B, C, H, W) -> (B, NP, C*P*P), patch vector ordered (c, ph, pw)
    B, C, H, W = x.shape
    P = patch_size
    x = x.reshape(B, C, H // P, P, W // P, P)
    x = x.transpose(0, 2, 4, 1, 3, 5)
    return x.reshape(B, (H // P) * (W // P), C * P * P)


def vit_forward(x, params):
    P = params["patch_size"]
    patches = extract_patches(x, P)                      # (B, NP, C*P*P)
    B, NP, CPP = patches.shape
    E = params["proj_w"].shape[1]

    emb = _row_launch(_matmul_bias_kernel, [patches.reshape(B * NP, CPP)],
                      [params["proj_w"], params["proj_b"]], E,
                      cost=_matmul_cost(B * NP, CPP, E))
    emb = emb.reshape(B, NP, E)

    cls = jnp.broadcast_to(params["cls_token"], (B, 1, E))
    xseq = jnp.concatenate([cls, emb], axis=1) + params["pos_embedding"]
    # dropout -> identity (inference)

    S = NP + 1
    S_pad = _round_up(S, 8)  # sublane-align tokens; padded keys masked in attn
    if S_pad != S:
        xseq = jnp.pad(xseq, ((0, 0), (0, S_pad - S), (0, 0)))

    x2d = xseq.reshape(B * S_pad, E)
    for blk in params["blocks"]:
        x2d = run_transformer_block(x2d, blk, B, S_pad, S,
                                    params["num_heads"], params["head_dim"])

    cls_final = x2d.reshape(B, S_pad, E)[:, 0]           # (B, E)
    logits = classifier_head(cls_final, params["norm_w"], params["norm_b"],
                             params["head_w"], params["head_b"])
    return logits[:, :params["num_classes"]]


# ----------------------------------------------------------------------------
# Main
# ----------------------------------------------------------------------------

if __name__ == "__main__":
    # Small ViT: image 16x16, patch 4 -> 16 patches + cls = 17 tokens (padded
    # to 24), embed_dim 32, 2 diff-attn heads (head_dim = 32//2//2 = 8),
    # mlp 64, depth 2, 10 classes.
    B, C, H = 2, 3, 16
    key = jax.random.PRNGKey(0)
    pkey, xkey = jax.random.split(key)

    params = init_params(
        pkey, image_size=H, patch_size=4, channels=C, embed_dim=32, depth=2,
        num_heads=2, mlp_dim=64, num_classes=10,
    )
    x = jax.random.normal(xkey, (B, C, H, H), jnp.float32)

    logits = vit_forward(x, params)
    jax.block_until_ready(logits)
    assert logits.shape == (B, 10) and logits.dtype == jnp.float32
    print("KERNEL_OK")
</pallas_src>

<mosaic_0001>
module attributes {stable_mosaic.version = 11 : i64} {
  func.func @_matmul_bias_kernel(%arg0: i32, %arg1: memref<32x48xf32, #tpu.memory_space<vmem>>, %arg2: memref<48x32xbf16, #tpu.memory_space<vmem>>, %arg3: memref<1x32xf32, #tpu.memory_space<vmem>>, %arg4: memref<32x32xf32, #tpu.memory_space<vmem>>) attributes {dimension_semantics = [#tpu.dimension_semantics<parallel>], iteration_bounds = array<i64: 1>, scalar_prefetch = 0 : i64, scratch_operands = 0 : i64, tpu.core_type = #tpu.core_type<tc>, window_params = [{transform_indices = @transform_0, window_bounds = array<i64: 32, 48>}, {pipeline_mode = #tpu.pipeline_mode<synchronous>, transform_indices = @transform_1, window_bounds = array<i64: 48, 32>}, {pipeline_mode = #tpu.pipeline_mode<synchronous>, transform_indices = @transform_2, window_bounds = array<i64: 1, 32>}, {transform_indices = @transform_3, window_bounds = array<i64: 32, 32>}]} {
    %c0 = arith.constant 0 : index
    %c0_0 = arith.constant 0 : index
    %0 = vector.load %arg1[%c0, %c0_0] : memref<32x48xf32, #tpu.memory_space<vmem>>, vector<32x48xf32>
    %1 = arith.truncf %0 : vector<32x48xf32> to vector<32x48xbf16>
    %c0_1 = arith.constant 0 : index
    %c0_2 = arith.constant 0 : index
    %2 = vector.load %arg2[%c0_1, %c0_2] : memref<48x32xbf16, #tpu.memory_space<vmem>>, vector<48x32xbf16>
    %cst = arith.constant dense<0.000000e+00> : vector<32x32xf32>
    %3 = tpu.matmul %1, %2, %cst {dimension_numbers = #tpu.dot_dimension_numbers<[1], [0], [0], [1], [0, 0, 1, 1], [], []>} : vector<32x48xbf16>, vector<48x32xbf16>, vector<32x32xf32> -> vector<32x32xf32>
    %c0_3 = arith.constant 0 : index
    %c0_4 = arith.constant 0 : index
    %4 = vector.load %arg3[%c0_3, %c0_4] : memref<1x32xf32, #tpu.memory_space<vmem>>, vector<1x32xf32>
    %5 = vector.broadcast %4 : vector<1x32xf32> to vector<32x32xf32>
    %6 = arith.addf %3, %5 : vector<32x32xf32>
    %c0_5 = arith.constant 0 : index
    %c0_6 = arith.constant 0 : index
    %7 = vector.load %arg4[%c0_5, %c0_6] : memref<32x32xf32, #tpu.memory_space<vmem>>, vector<32x32xf32>
    tpu.vector_store %arg4[%c0_5, %c0_6], %6 {strides = array<i32>} : memref<32x32xf32, #tpu.memory_space<vmem>>, vector<32x32xf32>,
    return
  }
  func.func @transform_0(%arg0: i32) -> (i32, i32) {
    %c0_i32 = arith.constant 0 : i32
    %c0_i32_0 = arith.constant 0 : i32
    return %arg0, %c0_i32 : i32, i32
  }
  func.func @transform_1(%arg0: i32) -> (i32, i32) {
    %c0_i32 = arith.constant 0 : i32
    %c0_i32_0 = arith.constant 0 : i32
    %c0_i32_1 = arith.constant 0 : i32
    return %c0_i32, %c0_i32_0 : i32, i32
  }
  func.func @transform_2(%arg0: i32) -> (i32, i32) {
    %c0_i32 = arith.constant 0 : i32
    %c0_i32_0 = arith.constant 0 : i32
    %c0_i32_1 = arith.constant 0 : i32
    return %c0_i32, %c0_i32_0 : i32, i32
  }
  func.func @transform_3(%arg0: i32) -> (i32, i32) {
    %c0_i32 = arith.constant 0 : i32
    %c0_i32_0 = arith.constant 0 : i32
    return %arg0, %c0_i32 : i32, i32
  }
}

</mosaic_0001>

<llo_original>
// kernel: tpu_custom_call.1
$region0: #{tpu_custom_call.1}
  #allocation0 [shape = 'u32[]', space=smem, size = 0x4, offset = 0x4, fixed_abs, tag = 'smem constant byte address 0x4 - core index']
  #allocation1 [shape = 'u32[144,128]{1,0:T(1,128)}', space=vmem, size = 0x12000, scoped, tag = 'internal scratch']
  %s0 = inlined_call_operand.vmem [shape: f32[32,48], index: 0, kind: input, shape index: {}]
  %s1 = inlined_call_operand.vmem [shape: bf16[48,32], index: 1, kind: input, shape index: {}]
  %s2 = inlined_call_operand.vmem [shape: f32[1,32], index: 2, kind: input, shape index: {}]
  %s3 = inlined_call_operand.hbm [shape: f32[32,32], index: 3, kind: output, shape index: {}]
  %s4 = sld [smem:[#allocation0]]
  $region22: #{tpu_custom_call.1} parent=0
    _
  %s6 = ssub.s32 1, %s4
  %s7 = scalar_select 0, %s6, %s4
  $region1: #{tpu_custom_call.1} parent=0
    #allocation2 [shape = 'u8[16384]{0}', space=vmem, size = 0x4000, scoped, tag = 'output window, operand 0, single buffered']
    #allocation3 [shape = 's32[1]{0}', space=sflag, size = 0x4, scoped, tag = 'scoped memory for tpu_custom_call.1']
    %8 = vsyncpa [#allocation3], 0
    // Predicated region
    $region2: #{tpu_custom_call.1} parent=1 // pred_check
      _
    $region3: #{tpu_custom_call.1} parent=1 // pred_check_branch
      %10 = sbr.rel (0) target = $region5
    $region4: #{tpu_custom_call.1} parent=1 // pred_region
      _
    $region5: #{tpu_custom_call.1} parent=1 // pred_fallthru
      _
    // Predicated region
    $region6: #{tpu_custom_call.1} parent=1 // pred_check
      _
    $region7: #{tpu_custom_call.1} parent=1 // pred_check_branch
      %12 = sbr.rel (0) target = $region9
    $region8: #{tpu_custom_call.1} parent=1 // pred_region
      _
    $region9: #{tpu_custom_call.1} parent=1 // pred_fallthru
      _
    // Predicated region
    $region10: #{tpu_custom_call.1} parent=1 // pred_check
      _
    $region11: #{tpu_custom_call.1} parent=1 // pred_check_branch
      %14 = sbr.rel (0) target = $region13
    $region12: #{tpu_custom_call.1} parent=1 // pred_region
      _
    $region13: #{tpu_custom_call.1} parent=1 // pred_fallthru
      _
    %v16 = vld [vmem:[%s0] sm:$0xff]
    %v17 = vld [vmem:[%s0 + $0x8] sm:$0xff]
    %v18 = vld [vmem:[%s0 + $0x10] sm:$0xff]
    %v19 = vld [vmem:[%s0 + $0x18] sm:$0xff]
    %v20 = vpack.c.bf16 %v17, %v16
    %v21 = vpack.c.bf16 %v19, %v18
    %v22 = vld [vmem:[%s1] sm:$0xf]
    %v23 = vld [vmem:[%s1 + $0x4] sm:$0xf]
    %v24 = vld [vmem:[%s1 + $0x8] sm:$0xf]
    %v25 = vld [vmem:[%s1 + $0xc] sm:$0xf]
    %v26 = vld [vmem:[%s1 + $0x10] sm:$0xf]
    %v27 = vld [vmem:[%s1 + $0x14] sm:$0xf]
    %v28 = vld [vmem:[%s2] sm:$0x1]
    %v30 = vlaneseq
    %v31 = vshrl.u32 %v30, 7
    %v32 = vsub.s32 0, %v31
    %v33 = vrot.slane %v28, %v32
    %v41 = vunpack.c.l.b16 %v22
    %v42 = vunpack.c.l.b16 %v23
    %v43 = vunpack.c.l.b16 %v24
    %v44 = vunpack.c.l.b16 %v25
    %v45 = vunpack.c.l.b16 %v26
    %v46 = vunpack.c.l.b16 %v27
    %v47 = vpack.c.b16 %v42, %v41
    %v48 = vpack.c.b16 %v44, %v43
    %v49 = vpack.c.b16 %v46, %v45
    %vm53 = vcmask 392192
    %v55 = vsel %vm53, %v20, 0
    %v58 = vsel %vm53, %v21, 0
    %60 = vmatprep.subr.bf16.mxu0 0
    %61 = vmatpush1.bf16.msra.mxu0 %v47
    %62 = vmatprep.subr.bf16.mxu0 0
    %63 = vmatpush1.bf16.msra.mxu0 %v48
    %64 = vmatprep.subr.bf16.mxu0 0
    %65 = vmatpush1.bf16.msra.mxu0 %v49
    %66 = vmatprep.subr.bf16.mxu0 0
    %67 = vmatpush1.bf16.msra.mxu0 0
    %68 = vmatprep.subr.bf16.mxu0 0
    %69 = vmatpush1.bf16.msra.mxu0 0
    %70 = vmatprep.subr.bf16.mxu0 0
    %71 = vmatpush1.bf16.msra.mxu0 0
    %72 = vmatprep.subr.bf16.mxu0 0
    %73 = vmatpush1.bf16.msra.mxu0 0
    %74 = vmatprep.subr.bf16.mxu0 0
    %75 = vmatpush1.bf16.msra.mxu0 0
    %76 = vmatprep.subr.bf16.mxu0 0
    %77 = vmatpush1.bf16.msra.mxu0 0
    %78 = vmatprep.subr.bf16.mxu0 0
    %79 = vmatpush1.bf16.msra.mxu0 0
    %80 = vmatprep.subr.bf16.mxu0 0
    %81 = vmatpush1.bf16.msra.mxu0 0
    %82 = vmatprep.subr.bf16.mxu0 0
    %83 = vmatpush1.bf16.msra.mxu0 0
    %84 = vmatprep.subr.bf16.mxu0 0
    %85 = vmatpush1.bf16.msra.mxu0 0
    %86 = vmatprep.subr.bf16.mxu0 0
    %87 = vmatpush1.bf16.msra.mxu0 0
    %88 = vmatprep.subr.bf16.mxu0 0
    %89 = vmatpush1.bf16.msra.mxu0 0
    %90 = vmatprep.subr.bf16.mxu0 0
    %91 = vmatpush1.bf16.msra.mxu0 0
    %92 = vmatprep.mubr.bf16.mxu0 0
    %93 = vmatmul.mubr.bf16.gmra.mrb[0].mxu0 %v55
    %v94 = vpop.f32.mrb[0].mxu0
    %v95 = vadd.f32 %v33, %v94
    %v96 = vpop.f32.mrb[0].mxu0
    %v97 = vpop.f32.mrb[0].mxu0
    %v98 = vadd.f32 %v33, %v97
    %v99 = vpop.f32.mrb[0].mxu0
    %100 = vmatprep.mubr.bf16.mxu0 0
    %101 = vmatmul.mubr.bf16.gmra.mrb[0].mxu0 %v58
    %v102 = vpop.f32.mrb[0].mxu0
    %v103 = vadd.f32 %v33, %v102
    %v104 = vpop.f32.mrb[0].mxu0
    %v105 = vpop.f32.mrb[0].mxu0
    %v106 = vadd.f32 %v33, %v105
    %v107 = vpop.f32.mrb[0].mxu0
    %108 = vdwg.mxu0
    %vm109 = vcmask 261120
    %110 = vst.msk [vmem:[#allocation2] sm:$0xff] %vm109, %v95
    %111 = vst.msk [vmem:[#allocation2 + $0x8] sm:$0xff] %vm109, %v98
    %112 = vst.msk [vmem:[#allocation2 + $0x10] sm:$0xff] %vm109, %v103
    %113 = vst.msk [vmem:[#allocation2 + $0x18] sm:$0xff] %vm109, %v106
    // Predicated region
    $region14: #{tpu_custom_call.1} parent=1 // pred_check
      _
    $region15: #{tpu_custom_call.1} parent=1 // pred_check_branch
      %115 = sbr.rel (0) target = $region17
    $region16: #{tpu_custom_call.1} parent=1 // pred_region
      %s117 = ssub.s32 512, 512
      %118 = vsyncadd [#allocation3], %s117
      %s119 = sshll.u32 [#allocation2], 4
      %s120 = int_to_ptr.vmem [resolvable:$true] %s119
      %125 = dma.vmem_to_hbm [thread:$0]  %s120, 512, %s3, [#allocation3], 128, 128, 8
    $region17: #{tpu_custom_call.1} parent=1 // pred_fallthru
      _
    // Predicated region
    $region18: #{tpu_custom_call.1} parent=1 // pred_check
      _
    $region19: #{tpu_custom_call.1} parent=1 // pred_check_branch
      %127 = sbr.rel (0) target = $region21
    $region20: #{tpu_custom_call.1} parent=1 // pred_region
      %128 = dma.done [#allocation3], 512
    $region21: #{tpu_custom_call.1} parent=1 // pred_fallthru
      _
    %129 = vsyncpa [#allocation3], 1

</llo_original>
